<compile_context>
chip_gen: v6e
topology: v6e:2x2x1
jax: 0.10.0
libtpu: 0.0.40
codegen_flags: <defaults>
</compile_context>

<pallas_src>
import functools

import jax
import jax.numpy as jnp
import numpy as np
from jax import lax
from jax.experimental import pallas as pl
from jax.experimental.pallas import tpu as pltpu


def _yolo_loss_kernel(pred_ref, tgt_ref, anch_ref, out_ref, acc_ref):
    """One (anchor, row-tile) grid step.

    pred_ref / tgt_ref : (1, C, R, 128) blocks, channel-major, lane-dense.
    anch_ref           : (1, 4, 128) block: rows = [w, h, 1/w, 1/h] broadcast over lanes.
    out_ref            : (1, 1, 8) per-anchor statistics (written on last step).
    acc_ref            : (8, R, 128) f32 VMEM scratch, per-statistic partial-sum planes:
        0: sum BCE-with-logits over no-obj cells     1: count of no-obj cells
        2: sum (sigmoid(conf) - iou)^2 over obj      3: sum squared box error (4 coords)
        4: sum cross-entropy over obj                5: count of obj cells
    """
    i = pl.program_id(1)
    nt = pl.num_programs(1)

    @pl.when(i == 0)
    def _():
        acc_ref[...] = jnp.zeros_like(acc_ref)

    C = pred_ref.shape[1]
    nc = C - 5

    def P(c):
        return pred_ref[0, c].astype(jnp.float32)     # (R, 128)

    def T(c):
        return tgt_ref[0, c].astype(jnp.float32)      # (R, 128)

    anch = anch_ref[0].astype(jnp.float32)            # (4, 128)
    aw, ah = anch[0:1], anch[1:2]                     # (1, 128) broadcast over sublanes
    inv_aw, inv_ah = anch[2:3], anch[3:4]

    conf_p = P(0)
    conf_t = T(0)
    obj = (conf_t == 1.0).astype(jnp.float32)
    noobj = (conf_t == 0.0).astype(jnp.float32)       # padded cells use conf_t = -1

    # ---- no-object loss: BCEWithLogits(pred_conf, tgt_conf) over no-obj cells ----
    t = jnp.exp(-jnp.abs(conf_p))
    bce = jnp.maximum(conf_p, 0.0) - conf_p * conf_t + jnp.log1p(t)
    acc_ref[0] += bce * noobj
    acc_ref[1] += noobj

    # sigmoid(conf) reusing t = exp(-|conf|)
    s_pos = 1.0 / (1.0 + t)
    sig_conf = jnp.where(conf_p >= 0.0, s_pos, 1.0 - s_pos)

    # ---- decoded box predictions and midpoint IoU ----
    sig_x = jax.nn.sigmoid(P(1))
    sig_y = jax.nn.sigmoid(P(2))
    pred_w_raw = P(3)
    pred_h_raw = P(4)
    pw = jnp.exp(pred_w_raw) * aw
    ph = jnp.exp(pred_h_raw) * ah

    tx, ty = T(1), T(2)
    tw, th = T(3), T(4)

    p_x1 = sig_x - 0.5 * pw
    p_x2 = sig_x + 0.5 * pw
    p_y1 = sig_y - 0.5 * ph
    p_y2 = sig_y + 0.5 * ph
    t_x1 = tx - 0.5 * tw
    t_x2 = tx + 0.5 * tw
    t_y1 = ty - 0.5 * th
    t_y2 = ty + 0.5 * th

    inter_w = jnp.maximum(jnp.minimum(p_x2, t_x2) - jnp.maximum(p_x1, t_x1), 0.0)
    inter_h = jnp.maximum(jnp.minimum(p_y2, t_y2) - jnp.maximum(p_y1, t_y1), 0.0)
    inter = inter_w * inter_h
    union = jnp.abs(pw * ph) + jnp.abs(tw * th) - inter + 1e-6
    iou = inter / union                                # exact divide (tolerance-safe)

    # ---- object loss: MSE(sigmoid(conf), iou * tgt_conf) over obj cells ----
    acc_ref[2] += obj * (sig_conf - iou * conf_t) ** 2
    acc_ref[5] += obj

    # ---- box loss: MSE([sig(xy), raw_wh], [tgt_xy, log(1e-6 + tgt_wh/anchor)]) ----
    tgt_w_log = jnp.log(1e-6 + tw * inv_aw)
    tgt_h_log = jnp.log(1e-6 + th * inv_ah)
    box_err = ((sig_x - tx) ** 2 + (sig_y - ty) ** 2
               + (pred_w_raw - tgt_w_log) ** 2 + (pred_h_raw - tgt_h_log) ** 2)
    acc_ref[3] += obj * box_err

    # ---- class loss: cross-entropy(pred_logits, tgt_class) over obj cells ----
    # Two streaming passes over the class channels (keeps register pressure low
    # for large class counts; no (nc, R, 128) one-hot materialization).
    lbl = T(5).astype(jnp.int32)
    m = P(5)
    for c in range(6, C):
        m = jnp.maximum(m, P(c))
    sum_e = jnp.zeros_like(m)
    logit_lbl = jnp.zeros_like(m)
    for k in range(nc):
        lc = P(5 + k)
        sum_e = sum_e + jnp.exp(lc - m)
        logit_lbl = logit_lbl + jnp.where(lbl == k, lc, 0.0)
    ce = m + jnp.log(sum_e) - logit_lbl
    acc_ref[4] += obj * ce

    # ---- cross-lane reductions + scatter, only once per anchor ----
    @pl.when(i == nt - 1)
    def _():
        lane = lax.broadcasted_iota(jnp.int32, (1, 1, 8), 2)
        res = jnp.zeros((1, 1, 8), jnp.float32)
        for k in range(6):
            res = res + jnp.where(lane == k, jnp.sum(acc_ref[k]), 0.0)
        out_ref[...] = res


@functools.partial(jax.jit, static_argnames=("rows_per_tile",))
def _yolo_loss_sums(pred, target, scaled_anchors, rows_per_tile=16):
    B, A, S1, S2, C = pred.shape
    LANES = 128
    P = B * S1 * S2

    nr = pl.cdiv(P, LANES)
    r = min(rows_per_tile, nr)
    if r < nr:
        r = max(8, (r // 8) * 8)          # keep (8,128) block constraint satisfied
    nr_pad = pl.cdiv(nr, r) * r
    pad = nr_pad * LANES - P

    # Channel-major, lane-dense layout: (A, C, NR, 128).
    pred_r = jnp.transpose(pred, (1, 4, 0, 2, 3)).reshape(A, C, P)
    tgt_r = jnp.transpose(target, (1, 4, 0, 2, 3)).reshape(A, C, P)
    if pad:
        pred_r = jnp.pad(pred_r, ((0, 0), (0, 0), (0, pad)))
        pad_t = jnp.zeros((A, C, pad), tgt_r.dtype).at[:, 0, :].set(-1.0)
        tgt_r = jnp.concatenate([tgt_r, pad_t], axis=-1)
    pred_r = pred_r.reshape(A, C, nr_pad, LANES)
    tgt_r = tgt_r.reshape(A, C, nr_pad, LANES)

    # Tiny per-anchor table: rows = [w, h, 1/w, 1/h], broadcast over 128 lanes.
    sa = scaled_anchors.astype(jnp.float32).reshape(A, 2)
    anch_tab = jnp.concatenate([sa, 1.0 / sa], axis=-1)          # (A, 4)
    anch_tab = jnp.broadcast_to(anch_tab[:, :, None], (A, 4, LANES))

    nt = nr_pad // r

    sums = pl.pallas_call(
        _yolo_loss_kernel,
        out_shape=jax.ShapeDtypeStruct((A, 1, 8), jnp.float32),
        grid_spec=pltpu.PrefetchScalarGridSpec(
            num_scalar_prefetch=0,
            grid=(A, nt),
            in_specs=[
                pl.BlockSpec((1, C, r, LANES), lambda a, i: (a, 0, i, 0)),
                pl.BlockSpec((1, C, r, LANES), lambda a, i: (a, 0, i, 0)),
                pl.BlockSpec((1, 4, LANES), lambda a, i: (a, 0, 0)),
            ],
            out_specs=pl.BlockSpec((1, 1, 8), lambda a, i: (a, 0, 0)),
            scratch_shapes=[pltpu.VMEM((8, r, LANES), jnp.float32)],
        ),
        compiler_params=pltpu.CompilerParams(
            dimension_semantics=("parallel", "arbitrary")),
    )(pred_r, tgt_r, anch_tab)

    return jnp.sum(sums, axis=(0, 1))    # (8,) global statistics


def yolo_loss2(pred, target, scaled_anchors, rows_per_tile=16):
    """Mirrors YOLOLoss2.forward: returns (total_loss, history)."""
    s = _yolo_loss_sums(pred, target, scaled_anchors, rows_per_tile=rows_per_tile)
    noobj_sum, noobj_cnt = s[0], s[1]
    objloss_sum, boxloss_sum, clsloss_sum, obj_cnt = s[2], s[3], s[4], s[5]

    no_object_loss = noobj_sum / jnp.maximum(noobj_cnt, 1.0)
    has_obj = obj_cnt > 0
    safe_cnt = jnp.maximum(obj_cnt, 1.0)
    object_loss = jnp.where(has_obj, objloss_sum / safe_cnt, 0.0)
    box_loss = jnp.where(has_obj, boxloss_sum / (safe_cnt * 4.0), 0.0)
    class_loss = jnp.where(has_obj, clsloss_sum / safe_cnt, 0.0)

    lambda_box = lambda_obj = lambda_class = lambda_noobj = 1.0
    total = (lambda_box * box_loss + lambda_obj * object_loss
             + lambda_class * class_loss + lambda_noobj * no_object_loss)

    # Matches the torch module's .item() calls (host sync; keep outside jit/grad).
    history = {
        "box_loss": float(box_loss) * lambda_box,
        "object_loss": float(object_loss) * lambda_obj,
        "no_object_loss": float(no_object_loss) * lambda_noobj,
        "class_loss": float(class_loss) * lambda_class,
        "total_loss": float(total),
    }
    return total, history


def _reference_loss(pred, target, scaled_anchors):
    """Pure-numpy replica of the PyTorch forward (boolean fancy-indexing)."""
    pred = np.asarray(pred, np.float64)
    target = np.asarray(target, np.float64)
    anchors = np.asarray(scaled_anchors, np.float64).reshape(1, 3, 1, 1, 2)

    def sigmoid(z):
        return 1.0 / (1.0 + np.exp(-z))

    obj = target[..., 0] == 1
    noobj = target[..., 0] == 0

    x = pred[..., 0:1][noobj]
    y = target[..., 0:1][noobj]
    bce = np.maximum(x, 0.0) - x * y + np.log1p(np.exp(-np.abs(x)))
    no_object_loss = bce.mean()

    if obj.sum() > 0:
        box_preds = np.concatenate(
            [sigmoid(pred[..., 1:3]), np.exp(pred[..., 3:5]) * anchors], axis=-1)
        bp = box_preds[obj]
        tb = target[..., 1:5][obj]
        p_x1, p_y1 = bp[:, 0:1] - bp[:, 2:3] / 2, bp[:, 1:2] - bp[:, 3:4] / 2
        p_x2, p_y2 = bp[:, 0:1] + bp[:, 2:3] / 2, bp[:, 1:2] + bp[:, 3:4] / 2
        t_x1, t_y1 = tb[:, 0:1] - tb[:, 2:3] / 2, tb[:, 1:2] - tb[:, 3:4] / 2
        t_x2, t_y2 = tb[:, 0:1] + tb[:, 2:3] / 2, tb[:, 1:2] + tb[:, 3:4] / 2
        inter = (np.clip(np.minimum(p_x2, t_x2) - np.maximum(p_x1, t_x1), 0, None)
                 * np.clip(np.minimum(p_y2, t_y2) - np.maximum(p_y1, t_y1), 0, None))
        a1 = np.abs((p_x2 - p_x1) * (p_y2 - p_y1))
        a2 = np.abs((t_x2 - t_x1) * (t_y2 - t_y1))
        ious = inter / (a1 + a2 - inter + 1e-6)
        object_loss = ((sigmoid(pred[..., 0:1][obj]) - ious * target[..., 0:1][obj]) ** 2).mean()

        pred2 = pred.copy()
        pred2[..., 1:3] = sigmoid(pred2[..., 1:3])
        tgt2 = target.copy()
        tgt2[..., 3:5] = np.log(1e-6 + tgt2[..., 3:5] / anchors)
        box_loss = ((pred2[..., 1:5][obj] - tgt2[..., 1:5][obj]) ** 2).mean()

        logits = pred[..., 5:][obj]
        labels = target[..., 5][obj].astype(int)
        m = logits.max(-1, keepdims=True)
        lse = (m + np.log(np.exp(logits - m).sum(-1, keepdims=True)))[:, 0]
        class_loss = (lse - logits[np.arange(len(labels)), labels]).mean()
    else:
        box_loss = object_loss = class_loss = 0.0

    return box_loss + object_loss + class_loss + no_object_loss


if __name__ == "__main__":
    B, A, S, NC = 2, 3, 8, 4
    C = 5 + NC
    key = jax.random.PRNGKey(0)
    k_pred, k_obj, k_xy, k_wh, k_cls = jax.random.split(key, 5)

    pred = jax.random.normal(k_pred, (B, A, S, S, C), dtype=jnp.float32)

    obj_flag = (jax.random.uniform(k_obj, (B, A, S, S)) < 0.3).astype(jnp.float32)
    xy = jax.random.uniform(k_xy, (B, A, S, S, 2), minval=0.05, maxval=0.95)
    wh = jax.random.uniform(k_wh, (B, A, S, S, 2), minval=0.5, maxval=2.0)
    cls = jax.random.randint(k_cls, (B, A, S, S, 1), 0, NC).astype(jnp.float32)

    mask = obj_flag[..., None]
    target = jnp.concatenate(
        [obj_flag[..., None], xy * mask, wh * mask, cls * mask,
         jnp.zeros((B, A, S, S, NC - 1), jnp.float32)],
        axis=-1,
    )
    scaled_anchors = jnp.array([[1.0, 1.0], [2.0, 1.5], [0.5, 0.8]], dtype=jnp.float32)

    total_loss, history = yolo_loss2(pred, target, scaled_anchors)
    total_loss = jax.block_until_ready(total_loss)

    ref_total = _reference_loss(np.array(pred), np.array(target), np.array(scaled_anchors))
    np.testing.assert_allclose(float(total_loss), ref_total, rtol=1e-3, atol=1e-4)

    print("KERNEL_OK")
</pallas_src>

<mosaic_0001>
module attributes {stable_mosaic.version = 11 : i64} {
  func.func @_yolo_loss_kernel(%arg0: i32, %arg1: i32, %arg2: memref<1x9x1x128xf32, #tpu.memory_space<vmem>>, %arg3: memref<1x9x1x128xf32, #tpu.memory_space<vmem>>, %arg4: memref<1x4x128xf32, #tpu.memory_space<vmem>>, %arg5: memref<1x1x8xf32, #tpu.memory_space<vmem>>, %arg6: memref<8x1x128xf32, #tpu.memory_space<vmem>>) attributes {dimension_semantics = [#tpu.dimension_semantics<parallel>, #tpu.dimension_semantics<arbitrary>], iteration_bounds = array<i64: 3, 1>, scalar_prefetch = 0 : i64, scratch_operands = 1 : i64, tpu.core_type = #tpu.core_type<tc>, window_params = [{transform_indices = @transform_0, window_bounds = array<i64: 1, 9, 1, 128>}, {transform_indices = @transform_1, window_bounds = array<i64: 1, 9, 1, 128>}, {transform_indices = @transform_2, window_bounds = array<i64: 1, 4, 128>}, {transform_indices = @transform_3, window_bounds = array<i64: 1, 1, 8>}]} {
    %c0_i32 = arith.constant 0 : i32
    %0 = arith.cmpi eq, %arg1, %c0_i32 : i32
    %1 = arith.extui %0 : i1 to i32
    %c0_i32_0 = arith.constant 0 : i32
    %2 = arith.cmpi ne, %1, %c0_i32_0 : i32
    scf.if %2 {
      %cst_138 = arith.constant 0.000000e+00 : f32
      %238 = vector.broadcast %cst_138 : f32 to vector<8x1x128xf32>
      %c0_139 = arith.constant 0 : index
      %c0_140 = arith.constant 0 : index
      %c0_141 = arith.constant 0 : index
      %239 = vector.load %arg6[%c0_139, %c0_140, %c0_141] : memref<8x1x128xf32, #tpu.memory_space<vmem>>, vector<8x1x128xf32>
      tpu.vector_store %arg6[%c0_139, %c0_140, %c0_141], %238 {strides = array<i32>} : memref<8x1x128xf32, #tpu.memory_space<vmem>>, vector<8x1x128xf32>,
    } else {
    }
    %c0 = arith.constant 0 : index
    %c0_1 = arith.constant 0 : index
    %c0_2 = arith.constant 0 : index
    %3 = vector.load %arg4[%c0, %c0_1, %c0_2] : memref<1x4x128xf32, #tpu.memory_space<vmem>>, vector<1x4x128xf32>
    %4 = vector.shape_cast %3 : vector<1x4x128xf32> to vector<4x128xf32>
    %5 = vector.extract_strided_slice %4 {offsets = [0, 0], sizes = [1, 128], strides = [1, 1]} : vector<4x128xf32> to vector<1x128xf32>
    %6 = vector.extract_strided_slice %4 {offsets = [1, 0], sizes = [1, 128], strides = [1, 1]} : vector<4x128xf32> to vector<1x128xf32>
    %7 = vector.extract_strided_slice %4 {offsets = [2, 0], sizes = [1, 128], strides = [1, 1]} : vector<4x128xf32> to vector<1x128xf32>
    %8 = vector.extract_strided_slice %4 {offsets = [3, 0], sizes = [1, 128], strides = [1, 1]} : vector<4x128xf32> to vector<1x128xf32>
    %c0_3 = arith.constant 0 : index
    %c0_4 = arith.constant 0 : index
    %c0_5 = arith.constant 0 : index
    %c0_6 = arith.constant 0 : index
    %9 = vector.load %arg2[%c0_3, %c0_4, %c0_5, %c0_6] : memref<1x9x1x128xf32, #tpu.memory_space<vmem>>, vector<1x1x1x128xf32>
    %10 = vector.shape_cast %9 : vector<1x1x1x128xf32> to vector<1x128xf32>
    %c0_7 = arith.constant 0 : index
    %c0_8 = arith.constant 0 : index
    %c0_9 = arith.constant 0 : index
    %c0_10 = arith.constant 0 : index
    %11 = vector.load %arg3[%c0_7, %c0_8, %c0_9, %c0_10] : memref<1x9x1x128xf32, #tpu.memory_space<vmem>>, vector<1x1x1x128xf32>
    %12 = vector.shape_cast %11 : vector<1x1x1x128xf32> to vector<1x128xf32>
    %cst = arith.constant 1.000000e+00 : f32
    %13 = vector.broadcast %cst : f32 to vector<1x128xf32>
    %14 = arith.cmpf oeq, %12, %13 : vector<1x128xf32>
    %15 = arith.extui %14 : vector<1x128xi1> to vector<1x128xi32>
    %16 = arith.sitofp %15 : vector<1x128xi32> to vector<1x128xf32>
    %cst_11 = arith.constant 0.000000e+00 : f32
    %17 = vector.broadcast %cst_11 : f32 to vector<1x128xf32>
    %18 = arith.cmpf oeq, %12, %17 : vector<1x128xf32>
    %19 = arith.extui %18 : vector<1x128xi1> to vector<1x128xi32>
    %20 = arith.sitofp %19 : vector<1x128xi32> to vector<1x128xf32>
    %21 = math.absf %10 : vector<1x128xf32>
    %cst_12 = arith.constant 0.000000e+00 : f32
    %22 = vector.broadcast %cst_12 : f32 to vector<1x128xf32>
    %23 = arith.subf %22, %21 : vector<1x128xf32>
    %24 = math.exp %23 : vector<1x128xf32>
    %cst_13 = arith.constant 0.000000e+00 : f32
    %25 = vector.broadcast %cst_13 : f32 to vector<1x128xf32>
    %26 = arith.maximumf %10, %25 : vector<1x128xf32>
    %27 = arith.mulf %10, %12 : vector<1x128xf32>
    %28 = arith.subf %26, %27 : vector<1x128xf32>
    %29 = math.log1p %24 : vector<1x128xf32>
    %30 = arith.addf %28, %29 : vector<1x128xf32>
    %c0_14 = arith.constant 0 : index
    %c0_15 = arith.constant 0 : index
    %c0_16 = arith.constant 0 : index
    %31 = vector.load %arg6[%c0_14, %c0_15, %c0_16] : memref<8x1x128xf32, #tpu.memory_space<vmem>>, vector<1x1x128xf32>
    %32 = vector.shape_cast %31 : vector<1x1x128xf32> to vector<1x128xf32>
    %33 = arith.mulf %30, %20 : vector<1x128xf32>
    %34 = arith.addf %32, %33 : vector<1x128xf32>
    %c0_17 = arith.constant 0 : index
    %c0_18 = arith.constant 0 : index
    %c0_19 = arith.constant 0 : index
    %35 = vector.load %arg6[%c0_17, %c0_18, %c0_19] : memref<8x1x128xf32, #tpu.memory_space<vmem>>, vector<1x1x128xf32>
    %36 = vector.shape_cast %35 : vector<1x1x128xf32> to vector<1x128xf32>
    %37 = vector.shape_cast %34 : vector<1x128xf32> to vector<1x1x128xf32>
    tpu.vector_store %arg6[%c0_17, %c0_18, %c0_19], %37 {strides = array<i32>} : memref<8x1x128xf32, #tpu.memory_space<vmem>>, vector<1x1x128xf32>,
    %c1 = arith.constant 1 : index
    %c0_20 = arith.constant 0 : index
    %c0_21 = arith.constant 0 : index
    %38 = vector.load %arg6[%c1, %c0_20, %c0_21] : memref<8x1x128xf32, #tpu.memory_space<vmem>>, vector<1x1x128xf32>
    %39 = vector.shape_cast %38 : vector<1x1x128xf32> to vector<1x128xf32>
    %40 = arith.addf %39, %20 : vector<1x128xf32>
    %c1_22 = arith.constant 1 : index
    %c0_23 = arith.constant 0 : index
    %c0_24 = arith.constant 0 : index
    %41 = vector.load %arg6[%c1_22, %c0_23, %c0_24] : memref<8x1x128xf32, #tpu.memory_space<vmem>>, vector<1x1x128xf32>
    %42 = vector.shape_cast %41 : vector<1x1x128xf32> to vector<1x128xf32>
    %43 = vector.shape_cast %40 : vector<1x128xf32> to vector<1x1x128xf32>
    tpu.vector_store %arg6[%c1_22, %c0_23, %c0_24], %43 {strides = array<i32>} : memref<8x1x128xf32, #tpu.memory_space<vmem>>, vector<1x1x128xf32>,
    %cst_25 = arith.constant 1.000000e+00 : f32
    %44 = vector.broadcast %cst_25 : f32 to vector<1x128xf32>
    %45 = arith.addf %44, %24 : vector<1x128xf32>
    %cst_26 = arith.constant 1.000000e+00 : f32
    %46 = vector.broadcast %cst_26 : f32 to vector<1x128xf32>
    %47 = arith.divf %46, %45 : vector<1x128xf32>
    %cst_27 = arith.constant 0.000000e+00 : f32
    %48 = vector.broadcast %cst_27 : f32 to vector<1x128xf32>
    %49 = arith.cmpf oge, %10, %48 : vector<1x128xf32>
    %cst_28 = arith.constant 1.000000e+00 : f32
    %50 = vector.broadcast %cst_28 : f32 to vector<1x128xf32>
    %51 = arith.subf %50, %47 : vector<1x128xf32>
    %52 = arith.select %49, %47, %51 : vector<1x128xi1>, vector<1x128xf32>
    %c0_29 = arith.constant 0 : index
    %c1_30 = arith.constant 1 : index
    %c0_31 = arith.constant 0 : index
    %c0_32 = arith.constant 0 : index
    %53 = vector.load %arg2[%c0_29, %c1_30, %c0_31, %c0_32] : memref<1x9x1x128xf32, #tpu.memory_space<vmem>>, vector<1x1x1x128xf32>
    %54 = vector.shape_cast %53 : vector<1x1x1x128xf32> to vector<1x128xf32>
    %55 = arith.negf %54 : vector<1x128xf32>
    %56 = math.exp %55 : vector<1x128xf32>
    %cst_33 = arith.constant 1.000000e+00 : f32
    %57 = vector.broadcast %cst_33 : f32 to vector<1x128xf32>
    %58 = arith.addf %57, %56 : vector<1x128xf32>
    %59 = arith.divf %57, %58 : vector<1x128xf32>
    %c0_34 = arith.constant 0 : index
    %c2 = arith.constant 2 : index
    %c0_35 = arith.constant 0 : index
    %c0_36 = arith.constant 0 : index
    %60 = vector.load %arg2[%c0_34, %c2, %c0_35, %c0_36] : memref<1x9x1x128xf32, #tpu.memory_space<vmem>>, vector<1x1x1x128xf32>
    %61 = vector.shape_cast %60 : vector<1x1x1x128xf32> to vector<1x128xf32>
    %62 = arith.negf %61 : vector<1x128xf32>
    %63 = math.exp %62 : vector<1x128xf32>
    %cst_37 = arith.constant 1.000000e+00 : f32
    %64 = vector.broadcast %cst_37 : f32 to vector<1x128xf32>
    %65 = arith.addf %64, %63 : vector<1x128xf32>
    %66 = arith.divf %64, %65 : vector<1x128xf32>
    %c0_38 = arith.constant 0 : index
    %c3 = arith.constant 3 : index
    %c0_39 = arith.constant 0 : index
    %c0_40 = arith.constant 0 : index
    %67 = vector.load %arg2[%c0_38, %c3, %c0_39, %c0_40] : memref<1x9x1x128xf32, #tpu.memory_space<vmem>>, vector<1x1x1x128xf32>
    %68 = vector.shape_cast %67 : vector<1x1x1x128xf32> to vector<1x128xf32>
    %c0_41 = arith.constant 0 : index
    %c4 = arith.constant 4 : index
    %c0_42 = arith.constant 0 : index
    %c0_43 = arith.constant 0 : index
    %69 = vector.load %arg2[%c0_41, %c4, %c0_42, %c0_43] : memref<1x9x1x128xf32, #tpu.memory_space<vmem>>, vector<1x1x1x128xf32>
    %70 = vector.shape_cast %69 : vector<1x1x1x128xf32> to vector<1x128xf32>
    %71 = math.exp %68 : vector<1x128xf32>
    %72 = arith.mulf %71, %5 : vector<1x128xf32>
    %73 = math.exp %70 : vector<1x128xf32>
    %74 = arith.mulf %73, %6 : vector<1x128xf32>
    %c0_44 = arith.constant 0 : index
    %c1_45 = arith.constant 1 : index
    %c0_46 = arith.constant 0 : index
    %c0_47 = arith.constant 0 : index
    %75 = vector.load %arg3[%c0_44, %c1_45, %c0_46, %c0_47] : memref<1x9x1x128xf32, #tpu.memory_space<vmem>>, vector<1x1x1x128xf32>
    %76 = vector.shape_cast %75 : vector<1x1x1x128xf32> to vector<1x128xf32>
    %c0_48 = arith.constant 0 : index
    %c2_49 = arith.constant 2 : index
    %c0_50 = arith.constant 0 : index
    %c0_51 = arith.constant 0 : index
    %77 = vector.load %arg3[%c0_48, %c2_49, %c0_50, %c0_51] : memref<1x9x1x128xf32, #tpu.memory_space<vmem>>, vector<1x1x1x128xf32>
    %78 = vector.shape_cast %77 : vector<1x1x1x128xf32> to vector<1x128xf32>
    %c0_52 = arith.constant 0 : index
    %c3_53 = arith.constant 3 : index
    %c0_54 = arith.constant 0 : index
    %c0_55 = arith.constant 0 : index
    %79 = vector.load %arg3[%c0_52, %c3_53, %c0_54, %c0_55] : memref<1x9x1x128xf32, #tpu.memory_space<vmem>>, vector<1x1x1x128xf32>
    %80 = vector.shape_cast %79 : vector<1x1x1x128xf32> to vector<1x128xf32>
    %c0_56 = arith.constant 0 : index
    %c4_57 = arith.constant 4 : index
    %c0_58 = arith.constant 0 : index
    %c0_59 = arith.constant 0 : index
    %81 = vector.load %arg3[%c0_56, %c4_57, %c0_58, %c0_59] : memref<1x9x1x128xf32, #tpu.memory_space<vmem>>, vector<1x1x1x128xf32>
    %82 = vector.shape_cast %81 : vector<1x1x1x128xf32> to vector<1x128xf32>
    %cst_60 = arith.constant 5.000000e-01 : f32
    %83 = vector.broadcast %cst_60 : f32 to vector<1x128xf32>
    %84 = arith.mulf %83, %72 : vector<1x128xf32>
    %85 = arith.subf %59, %84 : vector<1x128xf32>
    %cst_61 = arith.constant 5.000000e-01 : f32
    %86 = vector.broadcast %cst_61 : f32 to vector<1x128xf32>
    %87 = arith.mulf %86, %72 : vector<1x128xf32>
    %88 = arith.addf %59, %87 : vector<1x128xf32>
    %cst_62 = arith.constant 5.000000e-01 : f32
    %89 = vector.broadcast %cst_62 : f32 to vector<1x128xf32>
    %90 = arith.mulf %89, %74 : vector<1x128xf32>
    %91 = arith.subf %66, %90 : vector<1x128xf32>
    %cst_63 = arith.constant 5.000000e-01 : f32
    %92 = vector.broadcast %cst_63 : f32 to vector<1x128xf32>
    %93 = arith.mulf %92, %74 : vector<1x128xf32>
    %94 = arith.addf %66, %93 : vector<1x128xf32>
    %cst_64 = arith.constant 5.000000e-01 : f32
    %95 = vector.broadcast %cst_64 : f32 to vector<1x128xf32>
    %96 = arith.mulf %95, %80 : vector<1x128xf32>
    %97 = arith.subf %76, %96 : vector<1x128xf32>
    %cst_65 = arith.constant 5.000000e-01 : f32
    %98 = vector.broadcast %cst_65 : f32 to vector<1x128xf32>
    %99 = arith.mulf %98, %80 : vector<1x128xf32>
    %100 = arith.addf %76, %99 : vector<1x128xf32>
    %cst_66 = arith.constant 5.000000e-01 : f32
    %101 = vector.broadcast %cst_66 : f32 to vector<1x128xf32>
    %102 = arith.mulf %101, %82 : vector<1x128xf32>
    %103 = arith.subf %78, %102 : vector<1x128xf32>
    %cst_67 = arith.constant 5.000000e-01 : f32
    %104 = vector.broadcast %cst_67 : f32 to vector<1x128xf32>
    %105 = arith.mulf %104, %82 : vector<1x128xf32>
    %106 = arith.addf %78, %105 : vector<1x128xf32>
    %107 = arith.minimumf %88, %100 : vector<1x128xf32>
    %108 = arith.maximumf %85, %97 : vector<1x128xf32>
    %109 = arith.subf %107, %108 : vector<1x128xf32>
    %cst_68 = arith.constant 0.000000e+00 : f32
    %110 = vector.broadcast %cst_68 : f32 to vector<1x128xf32>
    %111 = arith.maximumf %109, %110 : vector<1x128xf32>
    %112 = arith.minimumf %94, %106 : vector<1x128xf32>
    %113 = arith.maximumf %91, %103 : vector<1x128xf32>
    %114 = arith.subf %112, %113 : vector<1x128xf32>
    %cst_69 = arith.constant 0.000000e+00 : f32
    %115 = vector.broadcast %cst_69 : f32 to vector<1x128xf32>
    %116 = arith.maximumf %114, %115 : vector<1x128xf32>
    %117 = arith.mulf %111, %116 : vector<1x128xf32>
    %118 = arith.mulf %72, %74 : vector<1x128xf32>
    %119 = math.absf %118 : vector<1x128xf32>
    %120 = arith.mulf %80, %82 : vector<1x128xf32>
    %121 = math.absf %120 : vector<1x128xf32>
    %122 = arith.addf %119, %121 : vector<1x128xf32>
    %123 = arith.subf %122, %117 : vector<1x128xf32>
    %cst_70 = arith.constant 9.99999997E-7 : f32
    %124 = vector.broadcast %cst_70 : f32 to vector<1x128xf32>
    %125 = arith.addf %123, %124 : vector<1x128xf32>
    %126 = arith.divf %117, %125 : vector<1x128xf32>
    %c2_71 = arith.constant 2 : index
    %c0_72 = arith.constant 0 : index
    %c0_73 = arith.constant 0 : index
    %127 = vector.load %arg6[%c2_71, %c0_72, %c0_73] : memref<8x1x128xf32, #tpu.memory_space<vmem>>, vector<1x1x128xf32>
    %128 = vector.shape_cast %127 : vector<1x1x128xf32> to vector<1x128xf32>
    %129 = arith.mulf %126, %12 : vector<1x128xf32>
    %130 = arith.subf %52, %129 : vector<1x128xf32>
    %131 = arith.mulf %130, %130 : vector<1x128xf32>
    %132 = arith.mulf %16, %131 : vector<1x128xf32>
    %133 = arith.addf %128, %132 : vector<1x128xf32>
    %c2_74 = arith.constant 2 : index
    %c0_75 = arith.constant 0 : index
    %c0_76 = arith.constant 0 : index
    %134 = vector.load %arg6[%c2_74, %c0_75, %c0_76] : memref<8x1x128xf32, #tpu.memory_space<vmem>>, vector<1x1x128xf32>
    %135 = vector.shape_cast %134 : vector<1x1x128xf32> to vector<1x128xf32>
    %136 = vector.shape_cast %133 : vector<1x128xf32> to vector<1x1x128xf32>
    tpu.vector_store %arg6[%c2_74, %c0_75, %c0_76], %136 {strides = array<i32>} : memref<8x1x128xf32, #tpu.memory_space<vmem>>, vector<1x1x128xf32>,
    %c5 = arith.constant 5 : index
    %c0_77 = arith.constant 0 : index
    %c0_78 = arith.constant 0 : index
    %137 = vector.load %arg6[%c5, %c0_77, %c0_78] : memref<8x1x128xf32, #tpu.memory_space<vmem>>, vector<1x1x128xf32>
    %138 = vector.shape_cast %137 : vector<1x1x128xf32> to vector<1x128xf32>
    %139 = arith.addf %138, %16 : vector<1x128xf32>
    %c5_79 = arith.constant 5 : index
    %c0_80 = arith.constant 0 : index
    %c0_81 = arith.constant 0 : index
    %140 = vector.load %arg6[%c5_79, %c0_80, %c0_81] : memref<8x1x128xf32, #tpu.memory_space<vmem>>, vector<1x1x128xf32>
    %141 = vector.shape_cast %140 : vector<1x1x128xf32> to vector<1x128xf32>
    %142 = vector.shape_cast %139 : vector<1x128xf32> to vector<1x1x128xf32>
    tpu.vector_store %arg6[%c5_79, %c0_80, %c0_81], %142 {strides = array<i32>} : memref<8x1x128xf32, #tpu.memory_space<vmem>>, vector<1x1x128xf32>,
    %143 = arith.mulf %80, %7 : vector<1x128xf32>
    %cst_82 = arith.constant 9.99999997E-7 : f32
    %144 = vector.broadcast %cst_82 : f32 to vector<1x128xf32>
    %145 = arith.addf %144, %143 : vector<1x128xf32>
    %146 = math.log %145 : vector<1x128xf32>
    %147 = arith.mulf %82, %8 : vector<1x128xf32>
    %cst_83 = arith.constant 9.99999997E-7 : f32
    %148 = vector.broadcast %cst_83 : f32 to vector<1x128xf32>
    %149 = arith.addf %148, %147 : vector<1x128xf32>
    %150 = math.log %149 : vector<1x128xf32>
    %151 = arith.subf %59, %76 : vector<1x128xf32>
    %152 = arith.mulf %151, %151 : vector<1x128xf32>
    %153 = arith.subf %66, %78 : vector<1x128xf32>
    %154 = arith.mulf %153, %153 : vector<1x128xf32>
    %155 = arith.addf %152, %154 : vector<1x128xf32>
    %156 = arith.subf %68, %146 : vector<1x128xf32>
    %157 = arith.mulf %156, %156 : vector<1x128xf32>
    %158 = arith.addf %155, %157 : vector<1x128xf32>
    %159 = arith.subf %70, %150 : vector<1x128xf32>
    %160 = arith.mulf %159, %159 : vector<1x128xf32>
    %161 = arith.addf %158, %160 : vector<1x128xf32>
    %c3_84 = arith.constant 3 : index
    %c0_85 = arith.constant 0 : index
    %c0_86 = arith.constant 0 : index
    %162 = vector.load %arg6[%c3_84, %c0_85, %c0_86] : memref<8x1x128xf32, #tpu.memory_space<vmem>>, vector<1x1x128xf32>
    %163 = vector.shape_cast %162 : vector<1x1x128xf32> to vector<1x128xf32>
    %164 = arith.mulf %16, %161 : vector<1x128xf32>
    %165 = arith.addf %163, %164 : vector<1x128xf32>
    %c3_87 = arith.constant 3 : index
    %c0_88 = arith.constant 0 : index
    %c0_89 = arith.constant 0 : index
    %166 = vector.load %arg6[%c3_87, %c0_88, %c0_89] : memref<8x1x128xf32, #tpu.memory_space<vmem>>, vector<1x1x128xf32>
    %167 = vector.shape_cast %166 : vector<1x1x128xf32> to vector<1x128xf32>
    %168 = vector.shape_cast %165 : vector<1x128xf32> to vector<1x1x128xf32>
    tpu.vector_store %arg6[%c3_87, %c0_88, %c0_89], %168 {strides = array<i32>} : memref<8x1x128xf32, #tpu.memory_space<vmem>>, vector<1x1x128xf32>,
    %c0_90 = arith.constant 0 : index
    %c5_91 = arith.constant 5 : index
    %c0_92 = arith.constant 0 : index
    %c0_93 = arith.constant 0 : index
    %169 = vector.load %arg3[%c0_90, %c5_91, %c0_92, %c0_93] : memref<1x9x1x128xf32, #tpu.memory_space<vmem>>, vector<1x1x1x128xf32>
    %170 = vector.shape_cast %169 : vector<1x1x1x128xf32> to vector<1x128xf32>
    %171 = arith.fptosi %170 : vector<1x128xf32> to vector<1x128xi32>
    %c0_94 = arith.constant 0 : index
    %c5_95 = arith.constant 5 : index
    %c0_96 = arith.constant 0 : index
    %c0_97 = arith.constant 0 : index
    %172 = vector.load %arg2[%c0_94, %c5_95, %c0_96, %c0_97] : memref<1x9x1x128xf32, #tpu.memory_space<vmem>>, vector<1x1x1x128xf32>
    %173 = vector.shape_cast %172 : vector<1x1x1x128xf32> to vector<1x128xf32>
    %c0_98 = arith.constant 0 : index
    %c6 = arith.constant 6 : index
    %c0_99 = arith.constant 0 : index
    %c0_100 = arith.constant 0 : index
    %174 = vector.load %arg2[%c0_98, %c6, %c0_99, %c0_100] : memref<1x9x1x128xf32, #tpu.memory_space<vmem>>, vector<1x1x1x128xf32>
    %175 = vector.shape_cast %174 : vector<1x1x1x128xf32> to vector<1x128xf32>
    %176 = arith.maximumf %173, %175 : vector<1x128xf32>
    %c0_101 = arith.constant 0 : index
    %c7 = arith.constant 7 : index
    %c0_102 = arith.constant 0 : index
    %c0_103 = arith.constant 0 : index
    %177 = vector.load %arg2[%c0_101, %c7, %c0_102, %c0_103] : memref<1x9x1x128xf32, #tpu.memory_space<vmem>>, vector<1x1x1x128xf32>
    %178 = vector.shape_cast %177 : vector<1x1x1x128xf32> to vector<1x128xf32>
    %179 = arith.maximumf %176, %178 : vector<1x128xf32>
    %c0_104 = arith.constant 0 : index
    %c8 = arith.constant 8 : index
    %c0_105 = arith.constant 0 : index
    %c0_106 = arith.constant 0 : index
    %180 = vector.load %arg2[%c0_104, %c8, %c0_105, %c0_106] : memref<1x9x1x128xf32, #tpu.memory_space<vmem>>, vector<1x1x1x128xf32>
    %181 = vector.shape_cast %180 : vector<1x1x1x128xf32> to vector<1x128xf32>
    %182 = arith.maximumf %179, %181 : vector<1x128xf32>
    %cst_107 = arith.constant 0.000000e+00 : f32
    %183 = vector.broadcast %cst_107 : f32 to vector<1x128xf32>
    %cst_108 = arith.constant 0.000000e+00 : f32
    %184 = vector.broadcast %cst_108 : f32 to vector<1x128xf32>
    %c0_109 = arith.constant 0 : index
    %c5_110 = arith.constant 5 : index
    %c0_111 = arith.constant 0 : index
    %c0_112 = arith.constant 0 : index
    %185 = vector.load %arg2[%c0_109, %c5_110, %c0_111, %c0_112] : memref<1x9x1x128xf32, #tpu.memory_space<vmem>>, vector<1x1x1x128xf32>
    %186 = vector.shape_cast %185 : vector<1x1x1x128xf32> to vector<1x128xf32>
    %187 = arith.subf %186, %182 : vector<1x128xf32>
    %188 = math.exp %187 : vector<1x128xf32>
    %189 = arith.addf %183, %188 : vector<1x128xf32>
    %c0_i32_113 = arith.constant 0 : i32
    %190 = vector.broadcast %c0_i32_113 : i32 to vector<1x128xi32>
    %191 = arith.cmpi eq, %171, %190 : vector<1x128xi32>
    %cst_114 = arith.constant 0.000000e+00 : f32
    %192 = vector.broadcast %cst_114 : f32 to vector<1x128xf32>
    %193 = arith.select %191, %186, %192 : vector<1x128xi1>, vector<1x128xf32>
    %194 = arith.addf %184, %193 : vector<1x128xf32>
    %c0_115 = arith.constant 0 : index
    %c6_116 = arith.constant 6 : index
    %c0_117 = arith.constant 0 : index
    %c0_118 = arith.constant 0 : index
    %195 = vector.load %arg2[%c0_115, %c6_116, %c0_117, %c0_118] : memref<1x9x1x128xf32, #tpu.memory_space<vmem>>, vector<1x1x1x128xf32>
    %196 = vector.shape_cast %195 : vector<1x1x1x128xf32> to vector<1x128xf32>
    %197 = arith.subf %196, %182 : vector<1x128xf32>
    %198 = math.exp %197 : vector<1x128xf32>
    %199 = arith.addf %189, %198 : vector<1x128xf32>
    %c1_i32 = arith.constant 1 : i32
    %200 = vector.broadcast %c1_i32 : i32 to vector<1x128xi32>
    %201 = arith.cmpi eq, %171, %200 : vector<1x128xi32>
    %cst_119 = arith.constant 0.000000e+00 : f32
    %202 = vector.broadcast %cst_119 : f32 to vector<1x128xf32>
    %203 = arith.select %201, %196, %202 : vector<1x128xi1>, vector<1x128xf32>
    %204 = arith.addf %194, %203 : vector<1x128xf32>
    %c0_120 = arith.constant 0 : index
    %c7_121 = arith.constant 7 : index
    %c0_122 = arith.constant 0 : index
    %c0_123 = arith.constant 0 : index
    %205 = vector.load %arg2[%c0_120, %c7_121, %c0_122, %c0_123] : memref<1x9x1x128xf32, #tpu.memory_space<vmem>>, vector<1x1x1x128xf32>
    %206 = vector.shape_cast %205 : vector<1x1x1x128xf32> to vector<1x128xf32>
    %207 = arith.subf %206, %182 : vector<1x128xf32>
    %208 = math.exp %207 : vector<1x128xf32>
    %209 = arith.addf %199, %208 : vector<1x128xf32>
    %c2_i32 = arith.constant 2 : i32
    %210 = vector.broadcast %c2_i32 : i32 to vector<1x128xi32>
    %211 = arith.cmpi eq, %171, %210 : vector<1x128xi32>
    %cst_124 = arith.constant 0.000000e+00 : f32
    %212 = vector.broadcast %cst_124 : f32 to vector<1x128xf32>
    %213 = arith.select %211, %206, %212 : vector<1x128xi1>, vector<1x128xf32>
    %214 = arith.addf %204, %213 : vector<1x128xf32>
    %c0_125 = arith.constant 0 : index
    %c8_126 = arith.constant 8 : index
    %c0_127 = arith.constant 0 : index
    %c0_128 = arith.constant 0 : index
    %215 = vector.load %arg2[%c0_125, %c8_126, %c0_127, %c0_128] : memref<1x9x1x128xf32, #tpu.memory_space<vmem>>, vector<1x1x1x128xf32>
    %216 = vector.shape_cast %215 : vector<1x1x1x128xf32> to vector<1x128xf32>
    %217 = arith.subf %216, %182 : vector<1x128xf32>
    %218 = math.exp %217 : vector<1x128xf32>
    %219 = arith.addf %209, %218 : vector<1x128xf32>
    %c3_i32 = arith.constant 3 : i32
    %220 = vector.broadcast %c3_i32 : i32 to vector<1x128xi32>
    %221 = arith.cmpi eq, %171, %220 : vector<1x128xi32>
    %cst_129 = arith.constant 0.000000e+00 : f32
    %222 = vector.broadcast %cst_129 : f32 to vector<1x128xf32>
    %223 = arith.select %221, %216, %222 : vector<1x128xi1>, vector<1x128xf32>
    %224 = arith.addf %214, %223 : vector<1x128xf32>
    %225 = math.log %219 : vector<1x128xf32>
    %226 = arith.addf %182, %225 : vector<1x128xf32>
    %227 = arith.subf %226, %224 : vector<1x128xf32>
    %c4_130 = arith.constant 4 : index
    %c0_131 = arith.constant 0 : index
    %c0_132 = arith.constant 0 : index
    %228 = vector.load %arg6[%c4_130, %c0_131, %c0_132] : memref<8x1x128xf32, #tpu.memory_space<vmem>>, vector<1x1x128xf32>
    %229 = vector.shape_cast %228 : vector<1x1x128xf32> to vector<1x128xf32>
    %230 = arith.mulf %16, %227 : vector<1x128xf32>
    %231 = arith.addf %229, %230 : vector<1x128xf32>
    %c4_133 = arith.constant 4 : index
    %c0_134 = arith.constant 0 : index
    %c0_135 = arith.constant 0 : index
    %232 = vector.load %arg6[%c4_133, %c0_134, %c0_135] : memref<8x1x128xf32, #tpu.memory_space<vmem>>, vector<1x1x128xf32>
    %233 = vector.shape_cast %232 : vector<1x1x128xf32> to vector<1x128xf32>
    %234 = vector.shape_cast %231 : vector<1x128xf32> to vector<1x1x128xf32>
    tpu.vector_store %arg6[%c4_133, %c0_134, %c0_135], %234 {strides = array<i32>} : memref<8x1x128xf32, #tpu.memory_space<vmem>>, vector<1x1x128xf32>,
    %c0_i32_136 = arith.constant 0 : i32
    %235 = arith.cmpi eq, %arg1, %c0_i32_136 : i32
    %236 = arith.extui %235 : i1 to i32
    %c0_i32_137 = arith.constant 0 : i32
    %237 = arith.cmpi ne, %236, %c0_i32_137 : i32
    scf.if %237 {
      %238 = tpu.iota {dimensions = array<i32: 2>} : vector<1x1x8xi32>
      %cst_138 = arith.constant 0.000000e+00 : f32
      %239 = vector.broadcast %cst_138 : f32 to vector<1x1x8xf32>
      %c0_i32_139 = arith.constant 0 : i32
      %240 = vector.broadcast %c0_i32_139 : i32 to vector<1x1x8xi32>
      %241 = arith.cmpi eq, %238, %240 : vector<1x1x8xi32>
      %c0_140 = arith.constant 0 : index
      %c0_141 = arith.constant 0 : index
      %c0_142 = arith.constant 0 : index
      %242 = vector.load %arg6[%c0_140, %c0_141, %c0_142] : memref<8x1x128xf32, #tpu.memory_space<vmem>>, vector<1x1x128xf32>
      %243 = vector.shape_cast %242 : vector<1x1x128xf32> to vector<1x128xf32>
      %244 = vector.shape_cast %243 : vector<1x128xf32> to vector<1x1x128xf32>
      %cst_143 = arith.constant dense<0.000000e+00> : vector<1xf32>
      %245 = vector.multi_reduction <add>, %244, %cst_143 [1, 2] : vector<1x1x128xf32> to vector<1xf32>
      %246 = vector.shape_cast %245 : vector<1xf32> to vector<1x1x1xf32>
      %247 = vector.extract %246[0, 0, 0] : f32 from vector<1x1x1xf32>
      %cst_144 = arith.constant 0.000000e+00 : f32
      %248 = vector.broadcast %247 : f32 to vector<1x1x8xf32>
      %249 = vector.broadcast %cst_144 : f32 to vector<1x1x8xf32>
      %250 = arith.select %241, %248, %249 : vector<1x1x8xi1>, vector<1x1x8xf32>
      %251 = arith.addf %239, %250 : vector<1x1x8xf32>
      %c1_i32_145 = arith.constant 1 : i32
      %252 = vector.broadcast %c1_i32_145 : i32 to vector<1x1x8xi32>
      %253 = arith.cmpi eq, %238, %252 : vector<1x1x8xi32>
      %c1_146 = arith.constant 1 : index
      %c0_147 = arith.constant 0 : index
      %c0_148 = arith.constant 0 : index
      %254 = vector.load %arg6[%c1_146, %c0_147, %c0_148] : memref<8x1x128xf32, #tpu.memory_space<vmem>>, vector<1x1x128xf32>
      %255 = vector.shape_cast %254 : vector<1x1x128xf32> to vector<1x128xf32>
      %256 = vector.shape_cast %255 : vector<1x128xf32> to vector<1x1x128xf32>
      %cst_149 = arith.constant dense<0.000000e+00> : vector<1xf32>
      %257 = vector.multi_reduction <add>, %256, %cst_149 [1, 2] : vector<1x1x128xf32> to vector<1xf32>
      %258 = vector.shape_cast %257 : vector<1xf32> to vector<1x1x1xf32>
      %259 = vector.extract %258[0, 0, 0] : f32 from vector<1x1x1xf32>
      %cst_150 = arith.constant 0.000000e+00 : f32
      %260 = vector.broadcast %259 : f32 to vector<1x1x8xf32>
      %261 = vector.broadcast %cst_150 : f32 to vector<1x1x8xf32>
      %262 = arith.select %253, %260, %261 : vector<1x1x8xi1>, vector<1x1x8xf32>
      %263 = arith.addf %251, %262 : vector<1x1x8xf32>
      %c2_i32_151 = arith.constant 2 : i32
      %264 = vector.broadcast %c2_i32_151 : i32 to vector<1x1x8xi32>
      %265 = arith.cmpi eq, %238, %264 : vector<1x1x8xi32>
      %c2_152 = arith.constant 2 : index
      %c0_153 = arith.constant 0 : index
      %c0_154 = arith.constant 0 : index
      %266 = vector.load %arg6[%c2_152, %c0_153, %c0_154] : memref<8x1x128xf32, #tpu.memory_space<vmem>>, vector<1x1x128xf32>
      %267 = vector.shape_cast %266 : vector<1x1x128xf32> to vector<1x128xf32>
      %268 = vector.shape_cast %267 : vector<1x128xf32> to vector<1x1x128xf32>
      %cst_155 = arith.constant dense<0.000000e+00> : vector<1xf32>
      %269 = vector.multi_reduction <add>, %268, %cst_155 [1, 2] : vector<1x1x128xf32> to vector<1xf32>
      %270 = vector.shape_cast %269 : vector<1xf32> to vector<1x1x1xf32>
      %271 = vector.extract %270[0, 0, 0] : f32 from vector<1x1x1xf32>
      %cst_156 = arith.constant 0.000000e+00 : f32
      %272 = vector.broadcast %271 : f32 to vector<1x1x8xf32>
      %273 = vector.broadcast %cst_156 : f32 to vector<1x1x8xf32>
      %274 = arith.select %265, %272, %273 : vector<1x1x8xi1>, vector<1x1x8xf32>
      %275 = arith.addf %263, %274 : vector<1x1x8xf32>
      %c3_i32_157 = arith.constant 3 : i32
      %276 = vector.broadcast %c3_i32_157 : i32 to vector<1x1x8xi32>
      %277 = arith.cmpi eq, %238, %276 : vector<1x1x8xi32>
      %c3_158 = arith.constant 3 : index
      %c0_159 = arith.constant 0 : index
      %c0_160 = arith.constant 0 : index
      %278 = vector.load %arg6[%c3_158, %c0_159, %c0_160] : memref<8x1x128xf32, #tpu.memory_space<vmem>>, vector<1x1x128xf32>
      %279 = vector.shape_cast %278 : vector<1x1x128xf32> to vector<1x128xf32>
      %280 = vector.shape_cast %279 : vector<1x128xf32> to vector<1x1x128xf32>
      %cst_161 = arith.constant dense<0.000000e+00> : vector<1xf32>
      %281 = vector.multi_reduction <add>, %280, %cst_161 [1, 2] : vector<1x1x128xf32> to vector<1xf32>
      %282 = vector.shape_cast %281 : vector<1xf32> to vector<1x1x1xf32>
      %283 = vector.extract %282[0, 0, 0] : f32 from vector<1x1x1xf32>
      %cst_162 = arith.constant 0.000000e+00 : f32
      %284 = vector.broadcast %283 : f32 to vector<1x1x8xf32>
      %285 = vector.broadcast %cst_162 : f32 to vector<1x1x8xf32>
      %286 = arith.select %277, %284, %285 : vector<1x1x8xi1>, vector<1x1x8xf32>
      %287 = arith.addf %275, %286 : vector<1x1x8xf32>
      %c4_i32 = arith.constant 4 : i32
      %288 = vector.broadcast %c4_i32 : i32 to vector<1x1x8xi32>
      %289 = arith.cmpi eq, %238, %288 : vector<1x1x8xi32>
      %c4_163 = arith.constant 4 : index
      %c0_164 = arith.constant 0 : index
      %c0_165 = arith.constant 0 : index
      %290 = vector.load %arg6[%c4_163, %c0_164, %c0_165] : memref<8x1x128xf32, #tpu.memory_space<vmem>>, vector<1x1x128xf32>
      %291 = vector.shape_cast %290 : vector<1x1x128xf32> to vector<1x128xf32>
      %292 = vector.shape_cast %291 : vector<1x128xf32> to vector<1x1x128xf32>
      %cst_166 = arith.constant dense<0.000000e+00> : vector<1xf32>
      %293 = vector.multi_reduction <add>, %292, %cst_166 [1, 2] : vector<1x1x128xf32> to vector<1xf32>
      %294 = vector.shape_cast %293 : vector<1xf32> to vector<1x1x1xf32>
      %295 = vector.extract %294[0, 0, 0] : f32 from vector<1x1x1xf32>
      %cst_167 = arith.constant 0.000000e+00 : f32
      %296 = vector.broadcast %295 : f32 to vector<1x1x8xf32>
      %297 = vector.broadcast %cst_167 : f32 to vector<1x1x8xf32>
      %298 = arith.select %289, %296, %297 : vector<1x1x8xi1>, vector<1x1x8xf32>
      %299 = arith.addf %287, %298 : vector<1x1x8xf32>
      %c5_i32 = arith.constant 5 : i32
      %300 = vector.broadcast %c5_i32 : i32 to vector<1x1x8xi32>
      %301 = arith.cmpi eq, %238, %300 : vector<1x1x8xi32>
      %c5_168 = arith.constant 5 : index
      %c0_169 = arith.constant 0 : index
      %c0_170 = arith.constant 0 : index
      %302 = vector.load %arg6[%c5_168, %c0_169, %c0_170] : memref<8x1x128xf32, #tpu.memory_space<vmem>>, vector<1x1x128xf32>
      %303 = vector.shape_cast %302 : vector<1x1x128xf32> to vector<1x128xf32>
      %304 = vector.shape_cast %303 : vector<1x128xf32> to vector<1x1x128xf32>
      %cst_171 = arith.constant dense<0.000000e+00> : vector<1xf32>
      %305 = vector.multi_reduction <add>, %304, %cst_171 [1, 2] : vector<1x1x128xf32> to vector<1xf32>
      %306 = vector.shape_cast %305 : vector<1xf32> to vector<1x1x1xf32>
      %307 = vector.extract %306[0, 0, 0] : f32 from vector<1x1x1xf32>
      %cst_172 = arith.constant 0.000000e+00 : f32
      %308 = vector.broadcast %307 : f32 to vector<1x1x8xf32>
      %309 = vector.broadcast %cst_172 : f32 to vector<1x1x8xf32>
      %310 = arith.select %301, %308, %309 : vector<1x1x8xi1>, vector<1x1x8xf32>
      %311 = arith.addf %299, %310 : vector<1x1x8xf32>
      %c0_173 = arith.constant 0 : index
      %c0_174 = arith.constant 0 : index
      %c0_175 = arith.constant 0 : index
      %312 = vector.load %arg5[%c0_173, %c0_174, %c0_175] : memref<1x1x8xf32, #tpu.memory_space<vmem>>, vector<1x1x8xf32>
      tpu.vector_store %arg5[%c0_173, %c0_174, %c0_175], %311 {strides = array<i32>} : memref<1x1x8xf32, #tpu.memory_space<vmem>>, vector<1x1x8xf32>,
    } else {
    }
    return
  }
  func.func @transform_0(%arg0: i32, %arg1: i32) -> (i32, i32, i32, i32) {
    %c0_i32 = arith.constant 0 : i32
    %c0_i32_0 = arith.constant 0 : i32
    %c0_i32_1 = arith.constant 0 : i32
    return %arg0, %c0_i32, %arg1, %c0_i32_0 : i32, i32, i32, i32
  }
  func.func @transform_1(%arg0: i32, %arg1: i32) -> (i32, i32, i32, i32) {
    %c0_i32 = arith.constant 0 : i32
    %c0_i32_0 = arith.constant 0 : i32
    %c0_i32_1 = arith.constant 0 : i32
    return %arg0, %c0_i32, %arg1, %c0_i32_0 : i32, i32, i32, i32
  }
  func.func @transform_2(%arg0: i32, %arg1: i32) -> (i32, i32, i32) {
    %c0_i32 = arith.constant 0 : i32
    %c0_i32_0 = arith.constant 0 : i32
    %c0_i32_1 = arith.constant 0 : i32
    return %arg0, %c0_i32, %c0_i32_0 : i32, i32, i32
  }
  func.func @transform_3(%arg0: i32, %arg1: i32) -> (i32, i32, i32) {
    %c0_i32 = arith.constant 0 : i32
    %c0_i32_0 = arith.constant 0 : i32
    %c0_i32_1 = arith.constant 0 : i32
    return %arg0, %c0_i32, %c0_i32_0 : i32, i32, i32
  }
}

</mosaic_0001>

<llo_original>
// kernel: _yolo_loss_sums.1
$region0: #{_yolo_loss_sums.1}
  #allocation0 [shape = 'u32[]', space=smem, size = 0x4, offset = 0x4, fixed_abs, tag = 'smem constant byte address 0x4 - core index']
  #allocation1 [shape = 'u32[144,128]{1,0:T(1,128)}', space=vmem, size = 0x12000, scoped, tag = 'internal scratch']
  #allocation2 [shape = 'f32[8,1,128]{2,1,0:T(1,128)}', space=vmem, size = 0x1000, scoped, tag = 'scratch operand']
  %s0 = inlined_call_operand.vmem [shape: f32[3,9,1,128], index: 0, kind: input, shape index: {}]
  %s1 = inlined_call_operand.vmem [shape: f32[3,9,1,128], index: 1, kind: input, shape index: {}]
  %s2 = inlined_call_operand.vmem [shape: f32[3,4,128], index: 2, kind: input, shape index: {}]
  %s3 = inlined_call_operand.vmem [shape: f32[3,1,8], index: 3, kind: output, shape index: {}]
  %s4 = sld [smem:[#allocation0]]
  $region53: #{_yolo_loss_sums.1} parent=0
    _
  %s6 = ssub.s32 1, %s4
  %s7 = scalar_select 0, %s6, %s4
  loop: start=0, step=1, limit=5
  $region2: #{_yolo_loss_sums.1} parent=0 // loop_pre_header
    _
  $region3: #{_yolo_loss_sums.1} parent=0 // loop_header
    %s9 = sphi 0, %s13
    %p10 = scmp.ge.s32.totalorder %s9, 5
    %s16 = sphi 0, %s28
    %s17 = sphi 0, %s24
    %s18 = sphi 0, %s16
    %s19 = sphi 0, %s17
    %s20 = sphi 0, %s18
    %s21 = sphi 0, %s19
    %s33 = sphi 0, %s35
    %s36 = sphi 0, %s33
    %s37 = sphi 0, %s36
    %s53 = sphi 0, %s37
    %s61 = sphi 0, %s63
    %s64 = sphi 0, %s61
    %s65 = sphi 0, %s64
    %s81 = sphi 0, %s65
    %s87 = sphi 0, %s89
    %s90 = sphi 0, %s87
    %s91 = sphi 0, %s90
    %s107 = sphi 0, %s91
    %s113 = sphi 0, %s115
    %s116 = sphi 0, %s113
    %s117 = sphi 0, %s116
    %s133 = sphi 0, %s117
  $region4: #{_yolo_loss_sums.1} parent=0 // loop_header_branch
    %12 = sbr.rel (%p10) target = $region8
  $region5: #{_yolo_loss_sums.1} parent=0 // loop_body
    %s14 = ssub.s32 %s9, 1
    %s15 = ssub.s32 %s9, 2
    %s22 = sadd.s32 1, %s17
    %p23 = scmp.ge.s32.totalorder %s22, 1
    %s24 = scalar_select %p23, 0, %s22
    %s25 = sadd.s32 1, %s16
    %s26 = scalar_select %p23, %s25, %s16
    %p27 = scmp.ge.s32.totalorder %s26, 3
    %s28 = scalar_select %p27, 0, %s26
    %s29 = ssub.s32 %s16, %s28
    %s30 = ssub.s32 %s17, %s24
    %s31 = sor.u32 %s29, %s30
    %p32 = scmp.eq.s32.totalorder %s31, 0
    %s34 = sadd.s32 %s33, 1
    %s35 = scalar_select %p32, %s33, %s34
    %p38 = pneg %p32
    %p39 = scmp.eq.s32.totalorder %s9, 2
    %p40 = por %p38, %p39
    %p41 = scmp.ne.s32.totalorder %s33, %s36
    %p42 = scmp.eq.s32.totalorder %s9, 0
    %p43 = por %p41, %p42
    %p44 = scmp.ne.s32.totalorder %s33, %s36
    %p45 = scmp.eq.s32.totalorder %s14, 2
    %p46 = por %p44, %p45
    %p47 = scmp.ne.s32.totalorder %s36, %s37
    %p48 = scmp.eq.s32.totalorder %s14, 0
    %p49 = por %p47, %p48
    %p50 = scmp.ne.s32.totalorder %s36, %s37
    %p51 = scmp.eq.s32.totalorder %s15, 2
    %p52 = por %p50, %p51
    %p54 = scmp.ne.s32.totalorder %s37, %s53
    %p55 = scmp.eq.s32.totalorder %s15, 0
    %p56 = por %p54, %p55
    %s57 = ssub.s32 %s16, %s28
    %s58 = ssub.s32 %s17, %s24
    %s59 = sor.u32 %s57, %s58
    %p60 = scmp.eq.s32.totalorder %s59, 0
    %s62 = sadd.s32 %s61, 1
    %s63 = scalar_select %p60, %s61, %s62
    %p66 = pneg %p60
    %p67 = scmp.eq.s32.totalorder %s9, 2
    %p68 = por %p66, %p67
    %p69 = scmp.ne.s32.totalorder %s61, %s64
    %p70 = scmp.eq.s32.totalorder %s9, 0
    %p71 = por %p69, %p70
    %p72 = scmp.ne.s32.totalorder %s61, %s64
    %p73 = scmp.eq.s32.totalorder %s14, 2
    %p74 = por %p72, %p73
    %p75 = scmp.ne.s32.totalorder %s64, %s65
    %p76 = scmp.eq.s32.totalorder %s14, 0
    %p77 = por %p75, %p76
    %p78 = scmp.ne.s32.totalorder %s64, %s65
    %p79 = scmp.eq.s32.totalorder %s15, 2
    %p80 = por %p78, %p79
    %p82 = scmp.ne.s32.totalorder %s65, %s81
    %p83 = scmp.eq.s32.totalorder %s15, 0
    %p84 = por %p82, %p83
    %s85 = ssub.s32 %s16, %s28
    %p86 = scmp.eq.s32.totalorder %s85, 0
    %s88 = sadd.s32 %s87, 1
    %s89 = scalar_select %p86, %s87, %s88
    %p92 = pneg %p86
    %p93 = scmp.eq.s32.totalorder %s9, 2
    %p94 = por %p92, %p93
    %p95 = scmp.ne.s32.totalorder %s87, %s90
    %p96 = scmp.eq.s32.totalorder %s9, 0
    %p97 = por %p95, %p96
    %p98 = scmp.ne.s32.totalorder %s87, %s90
    %p99 = scmp.eq.s32.totalorder %s14, 2
    %p100 = por %p98, %p99
    %p101 = scmp.ne.s32.totalorder %s90, %s91
    %p102 = scmp.eq.s32.totalorder %s14, 0
    %p103 = por %p101, %p102
    %p104 = scmp.ne.s32.totalorder %s90, %s91
    %p105 = scmp.eq.s32.totalorder %s15, 2
    %p106 = por %p104, %p105
    %p108 = scmp.ne.s32.totalorder %s91, %s107
    %p109 = scmp.eq.s32.totalorder %s15, 0
    %p110 = por %p108, %p109
    %s111 = ssub.s32 %s16, %s28
    %p112 = scmp.eq.s32.totalorder %s111, 0
    %s114 = sadd.s32 %s113, 1
    %s115 = scalar_select %p112, %s113, %s114
    %p118 = pneg %p112
    %p119 = scmp.eq.s32.totalorder %s9, 2
    %p120 = por %p118, %p119
    %p121 = scmp.ne.s32.totalorder %s113, %s116
    %p122 = scmp.eq.s32.totalorder %s9, 0
    %p123 = por %p121, %p122
    %p124 = scmp.ne.s32.totalorder %s113, %s116
    %p125 = scmp.eq.s32.totalorder %s14, 2
    %p126 = por %p124, %p125
    %p127 = scmp.ne.s32.totalorder %s116, %s117
    %p128 = scmp.eq.s32.totalorder %s14, 0
    %p129 = por %p127, %p128
    %p130 = scmp.ne.s32.totalorder %s116, %s117
    %p131 = scmp.eq.s32.totalorder %s15, 2
    %p132 = por %p130, %p131
    %p134 = scmp.ne.s32.totalorder %s117, %s133
    %p135 = scmp.eq.s32.totalorder %s15, 0
    %p136 = por %p134, %p135
    %p137 = scmp.le.s32.totalorder 1, %s9
    %p138 = scmp.lt.s32.totalorder %s9, 4
    %p139 = pnand %p137, %p138
    %p140 = pneg %p139
    // Predicated region
    $region9: #{_yolo_loss_sums.1} parent=5 // pred_check
      _
    $region10: #{_yolo_loss_sums.1} parent=5 // pred_check_branch
      %142 = sbr.rel (%p139) target = $region12
    $region11: #{_yolo_loss_sums.1} parent=5 // pred_region
      %s143 = ssub.s32 %s9, 1
    $region12: #{_yolo_loss_sums.1} parent=5 // pred_fallthru
      _
    %p144 = scmp.lt.s32.totalorder %s9, 3
    // Predicated region
    $region13: #{_yolo_loss_sums.1} parent=5 // pred_check
      %p145 = pneg %p144
    $region14: #{_yolo_loss_sums.1} parent=5 // pred_check_branch
      %147 = sbr.rel (%p145) target = $region16
    $region15: #{_yolo_loss_sums.1} parent=5 // pred_region
      // Predicated region
      $region17: #{_yolo_loss_sums.1} parent=15 // pred_check
        %p148 = pneg %p43
      $region18: #{_yolo_loss_sums.1} parent=15 // pred_check_branch
        %150 = sbr.rel (%p148) target = $region20
      $region19: #{_yolo_loss_sums.1} parent=15 // pred_region
        %p151 = scmp.lt.s32.totalorder %s16, 2
        %s152 = scalar_select %p151, %s16, 2
        %p153 = scmp.lt.s32.totalorder %s17, 0
        %s154 = scalar_select %p153, %s17, 0
        %s155 = smul.addr %s152, 9
        %s156 = sadd.s32 %s154, %s155
        %s157 = scalar_lea.vmem %s0, %s156
      $region20: #{_yolo_loss_sums.1} parent=15 // pred_fallthru
        _
      // Predicated region
      $region21: #{_yolo_loss_sums.1} parent=15 // pred_check
        %p158 = pneg %p71
      $region22: #{_yolo_loss_sums.1} parent=15 // pred_check_branch
        %160 = sbr.rel (%p158) target = $region24
      $region23: #{_yolo_loss_sums.1} parent=15 // pred_region
        %p161 = scmp.lt.s32.totalorder %s16, 2
        %s162 = scalar_select %p161, %s16, 2
        %p163 = scmp.lt.s32.totalorder %s17, 0
        %s164 = scalar_select %p163, %s17, 0
        %s165 = smul.addr %s162, 9
        %s166 = sadd.s32 %s164, %s165
        %s167 = scalar_lea.vmem %s1, %s166
      $region24: #{_yolo_loss_sums.1} parent=15 // pred_fallthru
        _
      // Predicated region
      $region25: #{_yolo_loss_sums.1} parent=15 // pred_check
        %p168 = pneg %p97
      $region26: #{_yolo_loss_sums.1} parent=15 // pred_check_branch
        %170 = sbr.rel (%p168) target = $region28
      $region27: #{_yolo_loss_sums.1} parent=15 // pred_region
        %p171 = scmp.lt.s32.totalorder %s16, 2
        %s172 = scalar_select %p171, %s16, 2
        %s173 = smul.addr %s172, 4
        %s174 = scalar_lea.vmem %s2, %s173
      $region28: #{_yolo_loss_sums.1} parent=15 // pred_fallthru
        _
    $region16: #{_yolo_loss_sums.1} parent=5 // pred_fallthru
      _
    %p175 = scmp.le.s32.totalorder 1, %s9
    %p176 = scmp.lt.s32.totalorder %s9, 4
    %p177 = pnand %p175, %p176
    %p178 = pneg %p177
    // Predicated region
    $region29: #{_yolo_loss_sums.1} parent=5 // pred_check
      _
    $region30: #{_yolo_loss_sums.1} parent=5 // pred_check_branch
      %180 = sbr.rel (%p177) target = $region32
    $region31: #{_yolo_loss_sums.1} parent=5 // pred_region
      %s181 = ssub.s32 %s9, 1
      %p182 = scmp.lt.s32.totalorder %s18, 2
      %s183 = scalar_select %p182, %s18, 2
      %p184 = scmp.lt.s32.totalorder %s19, 0
      %s185 = scalar_select %p184, %s19, 0
      %s186 = smul.addr %s183, 9
      %s187 = sadd.s32 %s185, %s186
      %s188 = scalar_lea.vmem %s0, %s187
      %p189 = pneg %p49
      %p190 = pneg %p46
      %p191 = scmp.lt.s32.totalorder %s18, 2
      %s192 = scalar_select %p191, %s18, 2
      %p193 = scmp.lt.s32.totalorder %s19, 0
      %s194 = scalar_select %p193, %s19, 0
      %s195 = smul.addr %s192, 9
      %s196 = sadd.s32 %s194, %s195
      %s197 = scalar_lea.vmem %s1, %s196
      %p198 = pneg %p77
      %p199 = pneg %p74
      %p200 = scmp.lt.s32.totalorder %s18, 2
      %s201 = scalar_select %p200, %s18, 2
      %s202 = smul.addr %s201, 4
      %s203 = scalar_lea.vmem %s2, %s202
      %p204 = pneg %p103
      %p205 = pneg %p100
      %p206 = pneg %p129
      %p207 = pneg %p126
      %p208 = scmp.lt.s32.totalorder %s18, 2
      %s209 = scalar_select %p208, %s18, 2
      %s210 = scalar_lea.vmem %s3, %s209
      %p211 = scmp.lt.s32.totalorder %s18, 2
      %s212 = scalar_select %p211, %s18, 2
      %p213 = scmp.lt.s32.totalorder %s19, 0
      %s214 = scalar_select %p213, %s19, 0
      %s215 = smul.addr %s212, 9
      %s216 = sadd.s32 %s214, %s215
      %s217 = scalar_lea.vmem %s0, %s216
      %p218 = scmp.lt.s32.totalorder %s18, 2
      %s219 = scalar_select %p218, %s18, 2
      %p220 = scmp.lt.s32.totalorder %s19, 0
      %s221 = scalar_select %p220, %s19, 0
      %s222 = smul.addr %s219, 9
      %s223 = sadd.s32 %s221, %s222
      %s224 = scalar_lea.vmem %s1, %s223
      %p225 = scmp.lt.s32.totalorder %s18, 2
      %s226 = scalar_select %p225, %s18, 2
      %s227 = smul.addr %s226, 4
      %s228 = scalar_lea.vmem %s2, %s227
      %p229 = scmp.lt.s32.totalorder %s18, 2
      %s230 = scalar_select %p229, %s18, 2
      %s231 = scalar_lea.vmem %s3, %s230
      %p232 = scmp.eq.s32.totalorder %s19, 0
      // Predicated region
      $region33: #{_yolo_loss_sums.1} parent=31 // pred_check
        %p233 = pneg %p232
      $region34: #{_yolo_loss_sums.1} parent=31 // pred_check_branch
        %235 = sbr.rel (%p233) target = $region36
      $region35: #{_yolo_loss_sums.1} parent=31 // pred_region
        %236 = vst [vmem:[#allocation2] sm:$0x1] 0.0
        %237 = vst [vmem:[#allocation2 + $0x1] sm:$0x1] 0.0
        %238 = vst [vmem:[#allocation2 + $0x2] sm:$0x1] 0.0
        %239 = vst [vmem:[#allocation2 + $0x3] sm:$0x1] 0.0
        %240 = vst [vmem:[#allocation2 + $0x4] sm:$0x1] 0.0
        %241 = vst [vmem:[#allocation2 + $0x5] sm:$0x1] 0.0
        %242 = vst [vmem:[#allocation2 + $0x6] sm:$0x1] 0.0
        %243 = vst [vmem:[#allocation2 + $0x7] sm:$0x1] 0.0
      $region36: #{_yolo_loss_sums.1} parent=31 // pred_fallthru
        _
      %v244 = vld [vmem:[%s228] sm:$0xf]
      %v245 = vld [vmem:[%s217] sm:$0x1]
      %v246 = vld [vmem:[%s224] sm:$0x1]
      %vm247 = vcmp.eq.f32.partialorder %v246, 1.0
      %v248 = vsel %vm247, 1, 0
      %v249 = vcvt.s32.f32 %v248
      %vm250 = vcmp.eq.f32.partialorder %v246, 0.0
      %v251 = vsel %vm250, 1, 0
      %v252 = vcvt.s32.f32 %v251
      %v253 = vand.u32 2147483647, %v245
      %v254 = vsub.f32 0.0, %v253
      %v255 = vmul.f32 %v254, 1.442695
      %v256 = vpow.pop %v255
      %v257 = vmax.f32 %v245, 0.0
      %v258 = vmul.f32 %v245, %v246
      %v259 = vsub.f32 %v257, %v258
      %v260 = vadd.f32 %v256, 1.0
      %v261 = vlog2.pop %v260
      %v262 = vmul.f32 %v261, 0.6931472
      %v263 = vmul.f32 -0.5, %v256
      %v264 = vadd.f32 %v263, 1.0
      %v265 = vmul.f32 %v264, %v256
      %v266 = vand.u32 2147483647, %v256
      %vm267 = vcmp.lt.f32.partialorder %v266, 0.0004427343
      %v268 = vsel %vm267, %v265, %v262
      %v269 = vadd.f32 %v259, %v268
      %v270 = vld [vmem:[#allocation2] sm:$0x1]
      %v271 = vmul.f32 %v269, %v252
      %v272 = vadd.f32 %v270, %v271
      %273 = vst [vmem:[#allocation2] sm:$0x1] %v272
      %s274 = scalar_lea.vmem [#allocation2], 1
      %v275 = vld [vmem:[%s274] sm:$0x1]
      %v276 = vadd.f32 %v275, %v252
      %277 = vst [vmem:[%s274] sm:$0x1] %v276
      %v278 = vadd.f32 %v256, 1.0
      %v279 = vrcp.pop %v278
      %v280 = vmul.f32 1.0, %v279
      %vm281 = vcmp.ge.f32.partialorder %v245, 0.0
      %v282 = vsub.f32 1.0, %v280
      %v283 = vsel %vm281, %v280, %v282
      %s284 = scalar_lea.vmem %s217, 1
      %v285 = vld [vmem:[%s284] sm:$0x1]
      %v286 = vxor.u32 %v285, 2147483648
      %v287 = vmul.f32 %v286, 1.442695
      %v288 = vpow.pop %v287
      %v289 = vadd.f32 %v288, 1.0
      %v290 = vrcp.pop %v289
      %v291 = vmul.f32 1.0, %v290
      %s292 = scalar_lea.vmem %s217, 2
      %v293 = vld [vmem:[%s292] sm:$0x1]
      %v294 = vxor.u32 %v293, 2147483648
      %v295 = vmul.f32 %v294, 1.442695
      %v296 = vpow.pop %v295
      %v297 = vadd.f32 %v296, 1.0
      %v298 = vrcp.pop %v297
      %v299 = vmul.f32 1.0, %v298
      %s300 = scalar_lea.vmem %s217, 3
      %v301 = vld [vmem:[%s300] sm:$0x1]
      %s302 = scalar_lea.vmem %s217, 4
      %v303 = vld [vmem:[%s302] sm:$0x1]
      %v304 = vmul.f32 %v301, 1.442695
      %v305 = vpow.pop %v304
      %v306 = vmul.f32 %v305, %v244
      %v307 = vmul.f32 %v303, 1.442695
      %v308 = vpow.pop %v307
      %v311 = vunpack.c.l.s4 1966171168
      %v312 = vunpack.c.0.s8 %v311
      %v313 = vlaneseq
      %v314 = vshrl.u32 %v313, 7
      %v315 = vsub.s32 %v312, %v314
      %v316 = vrot.slane %v244, %v315
      %v317 = vcombine.high %v316, %v316
      %v319 = vunpack.c.l.s4 1966171168
      %v320 = vunpack.c.0.s8 %v319
      %v321 = vlaneseq
      %v322 = vshrl.u32 %v321, 7
      %v323 = vsub.s32 %v320, %v322
      %v324 = vrot.slane %v316, %v323
      %v326 = vunpack.c.l.s4 1966171168
      %v327 = vunpack.c.0.s8 %v326
      %v328 = vlaneseq
      %v329 = vshrl.u32 %v328, 7
      %v330 = vsub.s32 %v327, %v329
      %v331 = vrot.slane %v317, %v330
      %v333 = vmul.f32 %v308, %v331
      %s334 = scalar_lea.vmem %s224, 1
      %v335 = vld [vmem:[%s334] sm:$0x1]
      %s336 = scalar_lea.vmem %s224, 2
      %v337 = vld [vmem:[%s336] sm:$0x1]
      %s338 = scalar_lea.vmem %s224, 3
      %v339 = vld [vmem:[%s338] sm:$0x1]
      %s340 = scalar_lea.vmem %s224, 4
      %v341 = vld [vmem:[%s340] sm:$0x1]
      %v342 = vmul.f32 %v306, 0.5
      %v343 = vsub.f32 %v291, %v342
      %v344 = vadd.f32 %v291, %v342
      %v345 = vmul.f32 %v333, 0.5
      %v346 = vsub.f32 %v299, %v345
      %v347 = vadd.f32 %v299, %v345
      %v348 = vmul.f32 %v339, 0.5
      %v349 = vsub.f32 %v335, %v348
      %v350 = vadd.f32 %v335, %v348
      %v351 = vmul.f32 %v341, 0.5
      %v352 = vsub.f32 %v337, %v351
      %v353 = vadd.f32 %v337, %v351
      %v354 = vmin.f32 %v344, %v350
      %v355 = vmax.f32 %v343, %v349
      %v356 = vsub.f32 %v354, %v355
      %v357 = vmax.f32 %v356, 0.0
      %v358 = vmin.f32 %v347, %v353
      %v359 = vmax.f32 %v346, %v352
      %v360 = vsub.f32 %v358, %v359
      %v361 = vmax.f32 %v360, 0.0
      %v362 = vmul.f32 %v357, %v361
      %v363 = vmul.f32 %v306, %v333
      %v364 = vand.u32 2147483647, %v363
      %v365 = vmul.f32 %v339, %v341
      %v366 = vand.u32 2147483647, %v365
      %v367 = vadd.f32 %v364, %v366
      %v368 = vsub.f32 %v367, %v362
      %v369 = vadd.f32 %v368, 1e-06
      %v370 = vrcp.pop %v369
      %v371 = vmul.f32 %v362, %v370
      %s372 = scalar_lea.vmem [#allocation2], 2
      %v373 = vld [vmem:[%s372] sm:$0x1]
      %v374 = vmul.f32 %v371, %v246
      %v375 = vsub.f32 %v283, %v374
      %v376 = vmul.f32 %v375, %v375
      %v377 = vmul.f32 %v249, %v376
      %v378 = vadd.f32 %v373, %v377
      %379 = vst [vmem:[%s372] sm:$0x1] %v378
      %s380 = scalar_lea.vmem [#allocation2], 5
      %v381 = vld [vmem:[%s380] sm:$0x1]
      %v382 = vadd.f32 %v381, %v249
      %383 = vst [vmem:[%s380] sm:$0x1] %v382
      %v384 = vcombine.high %v324, %v324
      %v386 = vmul.f32 %v339, %v384
      %v387 = vadd.f32 %v386, 1e-06
      %v388 = vlog2.pop %v387
      %v389 = vmul.f32 %v388, 0.6931472
      %v390 = vcombine.high %v331, %v331
      %v392 = vmul.f32 %v341, %v390
      %v393 = vadd.f32 %v392, 1e-06
      %v394 = vlog2.pop %v393
      %v395 = vmul.f32 %v394, 0.6931472
      %v396 = vsub.f32 %v291, %v335
      %v397 = vmul.f32 %v396, %v396
      %v398 = vsub.f32 %v299, %v337
      %v399 = vmul.f32 %v398, %v398
      %v400 = vadd.f32 %v397, %v399
      %v401 = vsub.f32 %v301, %v389
      %v402 = vmul.f32 %v401, %v401
      %v403 = vadd.f32 %v400, %v402
      %v404 = vsub.f32 %v303, %v395
      %v405 = vmul.f32 %v404, %v404
      %v406 = vadd.f32 %v403, %v405
      %s407 = scalar_lea.vmem [#allocation2], 3
      %v408 = vld [vmem:[%s407] sm:$0x1]
      %v409 = vmul.f32 %v249, %v406
      %v410 = vadd.f32 %v408, %v409
      %411 = vst [vmem:[%s407] sm:$0x1] %v410
      %s412 = scalar_lea.vmem %s224, 5
      %v413 = vld [vmem:[%s412] sm:$0x1]
      %v414 = vcvt.f32.s32.to.zero.pseudo %v413
      %s415 = scalar_lea.vmem %s217, 5
      %v416 = vld [vmem:[%s415] sm:$0x1]
      %s417 = scalar_lea.vmem %s217, 6
      %v418 = vld [vmem:[%s417] sm:$0x1]
      %v419 = vmax.f32 %v416, %v418
      %s420 = scalar_lea.vmem %s217, 7
      %v421 = vld [vmem:[%s420] sm:$0x1]
      %v422 = vmax.f32 %v419, %v421
      %s423 = scalar_lea.vmem %s217, 8
      %v424 = vld [vmem:[%s423] sm:$0x1]
      %v425 = vmax.f32 %v422, %v424
      %v426 = vsub.f32 %v416, %v425
      %v427 = vmul.f32 %v426, 1.442695
      %v428 = vpow.pop %v427
      %v429 = vadd.f32 %v428, 0.0
      %vm430 = vcmp.eq.s32.totalorder %v414, 0
      %v431 = vsel %vm430, %v416, 0.0
      %v432 = vadd.f32 %v431, 0.0
      %v433 = vsub.f32 %v418, %v425
      %v434 = vmul.f32 %v433, 1.442695
      %v435 = vpow.pop %v434
      %v436 = vadd.f32 %v429, %v435
      %vm437 = vcmp.eq.s32.totalorder %v414, 1
      %v438 = vsel %vm437, %v418, 0.0
      %v439 = vadd.f32 %v432, %v438
      %v440 = vsub.f32 %v421, %v425
      %v441 = vmul.f32 %v440, 1.442695
      %v442 = vpow.pop %v441
      %v443 = vadd.f32 %v436, %v442
      %vm444 = vcmp.eq.s32.totalorder %v414, 2
      %v445 = vsel %vm444, %v421, 0.0
      %v446 = vadd.f32 %v439, %v445
      %v447 = vsub.f32 %v424, %v425
      %v448 = vmul.f32 %v447, 1.442695
      %v449 = vpow.pop %v448
      %v450 = vadd.f32 %v443, %v449
      %vm451 = vcmp.eq.s32.totalorder %v414, 3
      %v452 = vsel %vm451, %v424, 0.0
      %v453 = vadd.f32 %v446, %v452
      %v454 = vlog2.pop %v450
      %v455 = vmul.f32 %v454, 0.6931472
      %v456 = vadd.f32 %v425, %v455
      %v457 = vsub.f32 %v456, %v453
      %s458 = scalar_lea.vmem [#allocation2], 4
      %v459 = vld [vmem:[%s458] sm:$0x1]
      %v460 = vmul.f32 %v249, %v457
      %v461 = vadd.f32 %v459, %v460
      %462 = vst [vmem:[%s458] sm:$0x1] %v461
      // Predicated region
      $region37: #{_yolo_loss_sums.1} parent=31 // pred_check
        %p463 = pneg %p232
      $region38: #{_yolo_loss_sums.1} parent=31 // pred_check_branch
        %465 = sbr.rel (%p463) target = $region40
      $region39: #{_yolo_loss_sums.1} parent=31 // pred_region
        %v466 = vlaneseq
        %v467 = vand.u32 %v466, 127
        %vm468 = vcmp.eq.s32.totalorder %v467, 0
        %v469 = vld [vmem:[#allocation2] sm:$0x1]
        %vm470 = vcmask 1040384
        %v471 = vsel %vm470, %v469, 0.0
        %472 = vadd.xlane.f32.xlu0 %v471
        %v473 = vpop.xlane.xlu0 %472
        %v474 = vrot.slane %v473, 4
        %v475 = vadd.f32 %v473, %v474
        %v476 = vrot.slane %v475, 2
        %v477 = vadd.f32 %v475, %v476
        %v478 = vrot.slane %v477, 1
        %v479 = vadd.f32 %v477, %v478
        %s480 = vtos %v479
        %v481 = vstv %s480
        %v482 = vsel %vm468, %v481, 0.0
        %v483 = vadd.f32 %v482, 0.0
        %vm484 = vcmp.eq.s32.totalorder %v467, 1
        %v485 = vld [vmem:[%s274] sm:$0x1]
        %v486 = vsel %vm470, %v485, 0.0
        %487 = vadd.xlane.f32.xlu0 %v486
        %v488 = vpop.xlane.xlu0 %487
        %v489 = vrot.slane %v488, 4
        %v490 = vadd.f32 %v488, %v489
        %v491 = vrot.slane %v490, 2
        %v492 = vadd.f32 %v490, %v491
        %v493 = vrot.slane %v492, 1
        %v494 = vadd.f32 %v492, %v493
        %s495 = vtos %v494
        %v496 = vstv %s495
        %v497 = vsel %vm484, %v496, 0.0
        %v498 = vadd.f32 %v483, %v497
        %vm499 = vcmp.eq.s32.totalorder %v467, 2
        %v500 = vld [vmem:[%s372] sm:$0x1]
        %v501 = vsel %vm470, %v500, 0.0
        %502 = vadd.xlane.f32.xlu0 %v501
        %v503 = vpop.xlane.xlu0 %502
        %v504 = vrot.slane %v503, 4
        %v505 = vadd.f32 %v503, %v504
        %v506 = vrot.slane %v505, 2
        %v507 = vadd.f32 %v505, %v506
        %v508 = vrot.slane %v507, 1
        %v509 = vadd.f32 %v507, %v508
        %s510 = vtos %v509
        %v511 = vstv %s510
        %v512 = vsel %vm499, %v511, 0.0
        %v513 = vadd.f32 %v498, %v512
        %vm514 = vcmp.eq.s32.totalorder %v467, 3
        %v515 = vld [vmem:[%s407] sm:$0x1]
        %v516 = vsel %vm470, %v515, 0.0
        %517 = vadd.xlane.f32.xlu0 %v516
        %v518 = vpop.xlane.xlu0 %517
        %v519 = vrot.slane %v518, 4
        %v520 = vadd.f32 %v518, %v519
        %v521 = vrot.slane %v520, 2
        %v522 = vadd.f32 %v520, %v521
        %v523 = vrot.slane %v522, 1
        %v524 = vadd.f32 %v522, %v523
        %s525 = vtos %v524
        %v526 = vstv %s525
        %v527 = vsel %vm514, %v526, 0.0
        %v528 = vadd.f32 %v513, %v527
        %vm529 = vcmp.eq.s32.totalorder %v467, 4
        %v530 = vld [vmem:[%s458] sm:$0x1]
        %v531 = vsel %vm470, %v530, 0.0
        %532 = vadd.xlane.f32.xlu0 %v531
        %v533 = vpop.xlane.xlu0 %532
        %v534 = vrot.slane %v533, 4
        %v535 = vadd.f32 %v533, %v534
        %v536 = vrot.slane %v535, 2
        %v537 = vadd.f32 %v535, %v536
        %v538 = vrot.slane %v537, 1
        %v539 = vadd.f32 %v537, %v538
        %s540 = vtos %v539
        %v541 = vstv %s540
        %v542 = vsel %vm529, %v541, 0.0
        %v543 = vadd.f32 %v528, %v542
        %vm544 = vcmp.eq.s32.totalorder %v467, 5
        %v545 = vld [vmem:[%s380] sm:$0x1]
        %v546 = vsel %vm470, %v545, 0.0
        %547 = vadd.xlane.f32.xlu0 %v546
        %v548 = vpop.xlane.xlu0 %547
        %v549 = vrot.slane %v548, 4
        %v550 = vadd.f32 %v548, %v549
        %v551 = vrot.slane %v550, 2
        %v552 = vadd.f32 %v550, %v551
        %v553 = vrot.slane %v552, 1
        %v554 = vadd.f32 %v552, %v553
        %s555 = vtos %v554
        %v556 = vstv %s555
        %v557 = vsel %vm544, %v556, 0.0
        %v558 = vadd.f32 %v543, %v557
        %vm559 = vcmask 57344
        %560 = vst.msk [vmem:[%s231] sm:$0x1] %vm559, %v558
      $region40: #{_yolo_loss_sums.1} parent=31 // pred_fallthru
        _
      %p561 = scmp.lt.s32.totalorder %s18, 2
      %s562 = scalar_select %p561, %s18, 2
      %s563 = scalar_lea.vmem %s3, %s562
      // Predicated region
      $region41: #{_yolo_loss_sums.1} parent=31 // pred_check
        %p564 = pneg %p126
      $region42: #{_yolo_loss_sums.1} parent=31 // pred_check_branch
        %566 = sbr.rel (%p564) target = $region44
      $region43: #{_yolo_loss_sums.1} parent=31 // pred_region
        _
      $region44: #{_yolo_loss_sums.1} parent=31 // pred_fallthru
        _
    $region32: #{_yolo_loss_sums.1} parent=5 // pred_fallthru
      _
    %p567 = scmp.le.s32.totalorder 2, %s9
    // Predicated region
    $region45: #{_yolo_loss_sums.1} parent=5 // pred_check
      %p568 = pneg %p567
    $region46: #{_yolo_loss_sums.1} parent=5 // pred_check_branch
      %570 = sbr.rel (%p568) target = $region48
    $region47: #{_yolo_loss_sums.1} parent=5 // pred_region
      %s571 = ssub.s32 %s9, 2
      // Predicated region
      $region49: #{_yolo_loss_sums.1} parent=47 // pred_check
        %p572 = pneg %p132
      $region50: #{_yolo_loss_sums.1} parent=47 // pred_check_branch
        %574 = sbr.rel (%p572) target = $region52
      $region51: #{_yolo_loss_sums.1} parent=47 // pred_region
        %p575 = scmp.lt.s32.totalorder %s20, 2
        %s576 = scalar_select %p575, %s20, 2
        %s577 = scalar_lea.vmem %s3, %s576
      $region52: #{_yolo_loss_sums.1} parent=47 // pred_fallthru
        _
    $region48: #{_yolo_loss_sums.1} parent=5 // pred_fallthru
      _
  $region6: #{_yolo_loss_sums.1} parent=0 // loop_footer
    %s13 = sadd.s32 1, %s9
  $region7: #{_yolo_loss_sums.1} parent=0 // loop_footer_branch
    %8 = sbr.rel target = $region3
  $region8: #{_yolo_loss_sums.1} parent=0 // loop_exit
    _

</llo_original>
